<compile_context>
chip_gen: v6e
topology: v6e:2x2x1
jax: 0.10.0
libtpu: 0.0.40
codegen_flags: <defaults>
</compile_context>

<pallas_src>
import functools

import numpy as np
import jax
import jax.numpy as jnp
from jax import lax
from jax.experimental import pallas as pl
from jax.experimental.pallas import tpu as pltpu


_GRAD_EPS = 0.2  # the "+0.2" in grad = 1 / ((m_p - m_q)^2 + 0.2)


def _gg_kernel_const():
    # Reproduces GGBilinear.get_kernel(): kern[p, q] with p = term index
    # (= unfold tap index 2*dh + dw) and q = 2*hi + wj (pixel-shuffle sub-pixel).
    h = np.array([-0.25, 0.25], dtype=np.float64)
    hg, wg = np.meshgrid(h, h, indexing="ij")
    terms = np.stack(
        [(0.5 - hg) * (0.5 - wg),
         (0.5 - hg) * (0.5 + wg),
         (0.5 + hg) * (0.5 - wg),
         (0.5 + hg) * (0.5 + wg)], axis=0)          # (4, 2, 2)  [p, hi, wj]
    return terms.reshape(4, 4)                      # (4, 4)     [p, q]


_KERN = _gg_kernel_const()

# The kernel drops the softmax max-subtraction: grad <= 1/_GRAD_EPS and
# kern <= 9/16, so logits <= 0.5625 / 0.2 = 2.8125 and exp() cannot overflow.
# If _GRAD_EPS ever changes, this bound must be revisited.
assert float(np.max(_KERN)) / _GRAD_EPS < 80.0


def _round_up(a, m):
    return (a + m - 1) // m * m


def _cdiv(a, m):
    return (a + m - 1) // m


def _make_kernel(TH, W2in, two_w, approx):
    shift2 = W2in - 2   # pltpu.roll by (width - 2)  ==  logical shift of +2 lanes
    kf = [[float(_KERN[p, q]) for q in range(4)] for p in range(4)]

    def rollc(a):
        # tap[v] = src[v + 2]; the 2 wrapped lanes land at >= W2in-2 >= 2W, i.e.
        # outside the stored output width, so they are harmless.
        return pltpu.roll(a, shift=shift2, axis=a.ndim - 1)

    def kernel(mm_ref, mh_ref, xa_ref, xb_ref, o_ref, w_ref):
        # mm_ref: (1, TH, W2in)      column-doubled channel mean, rows [t*TH, +TH)
        # mh_ref: (1, 8,  W2in)      mean halo rows [t*TH+TH, +8)  (planes need +2)
        # xa_ref: (1, TC, TH, W2in)  column-doubled input, this (row, C) tile
        # xb_ref: (1, TC, 8,  W2in)  input halo rows
        # o_ref : (1, TC, TH, 4W)    final rows 2*i (lanes [0,2W)) and 2*i+1
        #                            (lanes [2W,4W)) for every source row i
        # w_ref : (2, 4, TH, W2in)   softmax weights scratch (reused across C tiles)
        c_idx = pl.program_id(2)

        @pl.when(c_idx == 0)
        def _softmax_weights():
            mext = jnp.concatenate([mm_ref[0], mh_ref[0]], axis=0)   # (TH+8, W2in)
            m0 = mext[0:TH]
            m1 = mext[1:TH + 1]
            m2 = mext[2:TH + 2]
            m0s, m1s, m2s = rollc(m0), rollc(m1), rollc(m2)
            even = (lax.broadcasted_iota(jnp.int32, (TH, W2in), 1) % 2) == 0
            # mean tap of the position's own sub-pixel q: row offset resolves to
            # +1 for both planes, column offset resolves to the lane parity.
            m_self = jnp.where(even, m1s, m1)
            mean_taps = ((m0, m0s, m1, m1s),    # plane 0: final row 2*i   (q = 2 + r2)
                         (m1, m1s, m2, m2s))    # plane 1: final row 2*i+1 (q = r2)
            q_parity = ((3, 2), (1, 0))         # (q at even lanes, q at odd lanes)
            for plane in range(2):
                qe, qo = q_parity[plane]
                es = []
                for p in range(4):
                    d = mean_taps[plane][p] - m_self
                    g = 1.0 / (d * d + _GRAD_EPS)            # exact (review note)
                    kk = jnp.where(even, kf[p][qe], kf[p][qo])
                    es.append(jnp.exp(g * kk))               # logits <= 2.8125
                denom = es[0] + es[1] + es[2] + es[3]
                inv = pl.reciprocal(denom, approx=True) if approx else 1.0 / denom
                for p in range(4):
                    w_ref[plane, p] = es[p] * inv

        # Taps built once; each is consumed at most twice across the two
        # per-plane accumulators; each weight is read from VMEM exactly once.
        xext = jnp.concatenate([xa_ref[0], xb_ref[0]], axis=1)       # (TC, TH+8, W2in)
        x0 = xext[:, 0:TH]
        x1 = xext[:, 1:TH + 1]
        x2 = xext[:, 2:TH + 2]
        x0s, x1s, x2s = rollc(x0), rollc(x1), rollc(x2)
        plane_taps = ((x0, x0s, x1, x1s), (x1, x1s, x2, x2s))
        for plane in range(2):
            taps = plane_taps[plane]
            acc = w_ref[plane, 0] * taps[0]
            for p in range(1, 4):
                acc = acc + w_ref[plane, p] * taps[p]
            lo = plane * two_w
            o_ref[0, :, :, lo:lo + two_w] = acc[..., :two_w].astype(o_ref.dtype)

    return kernel


def gg_bilinear(x, *, tile_h=None, tile_c=None, approx_recip=True):
    """GGBilinear forward: content-adaptive 2x upsampling, (B,C,H,W)->(B,C,2H,2W)."""
    B, C, H, W = x.shape
    two_w = 2 * W
    W2in = _round_up(two_w + 2, 128)     # kernel-input lane width
    assert W2in >= two_w + 2             # roll-by-2 wrap lands outside [0, 2W)

    # --- tile selection (grow TH before shrinking TC; keep >=2 row tiles for
    # --- megacore when B == 1; 12 MiB working-set budget, v7x-safe) ----------
    if tile_h is not None:
        TH = tile_h
    else:
        n_t = max(1, _cdiv(H, 64))
        TH = _round_up(_cdiv(H, n_t), 8)
        if B == 1 and n_t == 1 and H > 8:
            TH = _round_up(_cdiv(H, 2), 8)
    assert TH % 8 == 0, TH
    n_h = _cdiv(H, TH)

    out_lanes = _round_up(4 * W, 128)
    if tile_c is not None:
        TC = tile_c
    else:
        def working_set(tc):
            blk_in = TH * W2in * 4
            halo_in = 8 * W2in * 4
            blk_out = TH * out_lanes * 4
            dbuf = 2 * (tc * (blk_in + halo_in) + blk_in + halo_in + tc * blk_out)
            taps = 8 * tc * blk_in            # 6 tap temporaries + 2 accumulators
            wts = (2 * 4 + 10) * blk_in       # weight scratch + weight-math temps
            return dbuf + taps + wts
        TC = max(1, min(C, 32))
        while TC > 1 and working_set(TC) > 12 * 1024 * 1024:
            TC //= 2
    n_c = _cdiv(C, TC)

    Hpad = n_h * TH
    Cpad = n_c * TC
    R = Hpad + 8                 # +8 rows so the last row tile's halo block exists
    th8 = TH // 8

    # --- column-doubled, zero-padded inputs (one fused XLA copy each) --------
    # xq[b, c, r, s] = xpad[b, c, r, (s+1)//2], xpad = 1-pixel zero-padded x.
    xpad = jnp.pad(x, ((0, 0), (0, Cpad - C), (1, R - (H + 1)), (1, 1)))
    xq = jnp.repeat(xpad, 2, axis=3)[:, :, :, 1:two_w + 3]
    xq = jnp.pad(xq, ((0, 0), (0, 0), (0, 0), (0, W2in - (two_w + 2))))

    m = jnp.mean(x.astype(jnp.float32), axis=1)
    mpad = jnp.pad(m, ((0, 0), (1, R - (H + 1)), (1, 1)))
    mq = jnp.repeat(mpad, 2, axis=2)[:, :, 1:two_w + 3]
    mq = jnp.pad(mq, ((0, 0), (0, 0), (0, W2in - (two_w + 2))))

    # --- scheduling hint for XLA around the custom call ----------------------
    n_pos = B * 2 * H * 2 * W
    cost = pl.CostEstimate(
        flops=n_pos * (C * 8 + 40),
        transcendentals=n_pos * 9,
        bytes_accessed=(xq.size * xq.dtype.itemsize + mq.size * mq.dtype.itemsize
                        + B * C * H * 4 * W * x.dtype.itemsize))

    out = pl.pallas_call(
        _make_kernel(TH, W2in, two_w, approx_recip),
        out_shape=jax.ShapeDtypeStruct((B, C, H, 4 * W), x.dtype),
        grid_spec=pltpu.PrefetchScalarGridSpec(
            num_scalar_prefetch=0,
            grid=(B, n_h, n_c),
            in_specs=[
                # channel mean: this row tile + 8-row halo (same array twice)
                pl.BlockSpec((1, TH, W2in), lambda b, t, c: (b, t, 0)),
                pl.BlockSpec((1, 8, W2in), lambda b, t, c: (b, (t + 1) * th8, 0)),
                # input: this (row, C) tile + halo rows (same array twice)
                pl.BlockSpec((1, TC, TH, W2in), lambda b, t, c: (b, c, t, 0)),
                pl.BlockSpec((1, TC, 8, W2in),
                             lambda b, t, c: (b, c, (t + 1) * th8, 0)),
            ],
            out_specs=pl.BlockSpec((1, TC, TH, 4 * W), lambda b, t, c: (b, c, t, 0)),
            scratch_shapes=[pltpu.VMEM((2, 4, TH, W2in), jnp.float32)],
        ),
        compiler_params=pltpu.CompilerParams(
            dimension_semantics=("parallel", "parallel", "arbitrary"),
            vmem_limit_bytes=32 * 1024 * 1024,
        ),
        cost_estimate=cost,
    )(mq, mq, xq, xq)

    # Lanes [0,2W) of out[..., i, :] are final row 2*i, lanes [2W,4W) are row
    # 2*i+1, so this reshape is a pure bitcast: no transpose, no crop, no copy.
    return out.reshape(B, C, 2 * H, 2 * W)


def gg_bilinear_ref(x):
    # Pure-JAX reference mirroring the PyTorch forward (float32).
    B, C, H, W = x.shape
    Hp, Wp = H + 1, W + 1
    xp = jnp.pad(x, ((0, 0), (0, 0), (1, 1), (1, 1)))
    views = [xp[:, :, dh:dh + Hp, dw:dw + Wp] for dh in (0, 1) for dw in (0, 1)]
    xu = jnp.stack(views, axis=1)                                  # (B, 4, C, Hp, Wp)
    m = jnp.mean(xu, axis=2)                                       # (B, 4, Hp, Wp)
    d = m[:, :, None] - m[:, None, :]                              # (B, p, q, Hp, Wp)
    grad = 1.0 / (d * d + _GRAD_EPS)
    kern = jnp.asarray(_KERN.astype(np.float32))
    w = jax.nn.softmax(grad * kern[None, :, :, None, None], axis=1)
    out4 = jnp.einsum("bpqhw,bpchw->bqchw", w, xu)
    out4 = out4.reshape(B, 2, 2, C, Hp, Wp)
    full = jnp.transpose(out4, (0, 3, 4, 1, 5, 2)).reshape(B, C, 2 * Hp, 2 * Wp)
    return full[:, :, 1:-1, 1:-1]


if __name__ == "__main__":
    key = jax.random.PRNGKey(0)
    x = jax.random.normal(key, (2, 4, 16, 16), dtype=jnp.float32)

    ref = jax.block_until_ready(gg_bilinear_ref(x))

    # 1) Exact reciprocals + small tiles: exercises the row halo across 2 row
    #    tiles and the weight-scratch reuse across 2 C tiles; tight tolerance.
    exact_fn = jax.jit(functools.partial(
        gg_bilinear, tile_h=8, tile_c=2, approx_recip=False))
    out_exact = jax.block_until_ready(exact_fn(x))
    assert out_exact.shape == (2, 4, 32, 32), out_exact.shape
    np.testing.assert_allclose(np.asarray(out_exact), np.asarray(ref),
                               rtol=1e-5, atol=1e-5)

    # 2) Default tiles + approximate (EUP) reciprocal on the softmax denominator
    #    only; looser tolerance purely for the hardware approx-recip low bits.
    fast_fn = jax.jit(gg_bilinear)
    out_fast = jax.block_until_ready(fast_fn(x))
    assert out_fast.shape == (2, 4, 32, 32), out_fast.shape
    np.testing.assert_allclose(np.asarray(out_fast), np.asarray(ref),
                               rtol=1e-2, atol=1e-2)

    print("KERNEL_OK")
</pallas_src>

<mosaic_0001>
module attributes {stable_mosaic.version = 11 : i64} {
  func.func @kernel(%arg0: i32, %arg1: i32, %arg2: i32, %arg3: memref<1x8x128xf32, #tpu.memory_space<vmem>>, %arg4: memref<1x8x128xf32, #tpu.memory_space<vmem>>, %arg5: memref<1x2x8x128xf32, #tpu.memory_space<vmem>>, %arg6: memref<1x2x8x128xf32, #tpu.memory_space<vmem>>, %arg7: memref<1x2x8x64xf32, #tpu.memory_space<vmem>>, %arg8: memref<2x4x8x128xf32, #tpu.memory_space<vmem>>) attributes {dimension_semantics = [#tpu.dimension_semantics<parallel>, #tpu.dimension_semantics<parallel>, #tpu.dimension_semantics<arbitrary>], iteration_bounds = array<i64: 2, 2, 2>, scalar_prefetch = 0 : i64, scratch_operands = 1 : i64, tpu.core_type = #tpu.core_type<tc>, window_params = [{transform_indices = @transform_0, window_bounds = array<i64: 1, 8, 128>}, {transform_indices = @transform_1, window_bounds = array<i64: 1, 8, 128>}, {transform_indices = @transform_2, window_bounds = array<i64: 1, 2, 8, 128>}, {transform_indices = @transform_3, window_bounds = array<i64: 1, 2, 8, 128>}, {transform_indices = @transform_4, window_bounds = array<i64: 1, 2, 8, 64>}]} {
    %c0_i32 = arith.constant 0 : i32
    %0 = arith.cmpi eq, %arg2, %c0_i32 : i32
    %1 = arith.extui %0 : i1 to i32
    %c0_i32_0 = arith.constant 0 : i32
    %2 = arith.cmpi ne, %1, %c0_i32_0 : i32
    scf.if %2 {
      %c0_46 = arith.constant 0 : index
      %c0_47 = arith.constant 0 : index
      %c0_48 = arith.constant 0 : index
      %68 = vector.load %arg3[%c0_46, %c0_47, %c0_48] : memref<1x8x128xf32, #tpu.memory_space<vmem>>, vector<1x8x128xf32>
      %69 = vector.shape_cast %68 : vector<1x8x128xf32> to vector<8x128xf32>
      %c0_49 = arith.constant 0 : index
      %c0_50 = arith.constant 0 : index
      %c0_51 = arith.constant 0 : index
      %70 = vector.load %arg4[%c0_49, %c0_50, %c0_51] : memref<1x8x128xf32, #tpu.memory_space<vmem>>, vector<1x8x128xf32>
      %71 = vector.shape_cast %70 : vector<1x8x128xf32> to vector<8x128xf32>
      %72 = tpu.concatenate %69, %71 in 0 : vector<8x128xf32>, vector<8x128xf32> -> vector<16x128xf32>
      %73 = vector.extract_strided_slice %72 {offsets = [0, 0], sizes = [8, 128], strides = [1, 1]} : vector<16x128xf32> to vector<8x128xf32>
      %74 = vector.extract_strided_slice %72 {offsets = [1, 0], sizes = [8, 128], strides = [1, 1]} : vector<16x128xf32> to vector<8x128xf32>
      %75 = vector.extract_strided_slice %72 {offsets = [2, 0], sizes = [8, 128], strides = [1, 1]} : vector<16x128xf32> to vector<8x128xf32>
      %c126_i32_52 = arith.constant 126 : i32
      %76 = tpu.dynamic_rotate %73 by %c126_i32_52 dim 1 : vector<8x128xf32>, i32 -> vector<8x128xf32>
      %c126_i32_53 = arith.constant 126 : i32
      %77 = tpu.dynamic_rotate %74 by %c126_i32_53 dim 1 : vector<8x128xf32>, i32 -> vector<8x128xf32>
      %c126_i32_54 = arith.constant 126 : i32
      %78 = tpu.dynamic_rotate %75 by %c126_i32_54 dim 1 : vector<8x128xf32>, i32 -> vector<8x128xf32>
      %79 = tpu.iota {dimensions = array<i32: 1>} : vector<8x128xi32>
      %c2_i32 = arith.constant 2 : i32
      %c0_i32_55 = arith.constant 0 : i32
      %80 = arith.cmpi eq, %c2_i32, %c0_i32_55 : i32
      %c1_i32 = arith.constant 1 : i32
      %81 = arith.select %80, %c1_i32, %c2_i32 : i32
      %82 = vector.broadcast %81 : i32 to vector<8x128xi32>
      %83 = arith.remsi %79, %82 : vector<8x128xi32>
      %c0_i32_56 = arith.constant 0 : i32
      %84 = vector.broadcast %c0_i32_56 : i32 to vector<8x128xi32>
      %85 = arith.cmpi ne, %83, %84 : vector<8x128xi32>
      %c0_i32_57 = arith.constant 0 : i32
      %86 = vector.broadcast %c0_i32_57 : i32 to vector<8x128xi32>
      %87 = arith.cmpi slt, %83, %86 : vector<8x128xi32>
      %c0_i32_58 = arith.constant 0 : i32
      %88 = arith.cmpi slt, %81, %c0_i32_58 : i32
      %89 = vector.broadcast %88 : i1 to vector<8x128xi1>
      %90 = vector.broadcast %89 : vector<8x128xi1> to vector<8x128xi1>
      %91 = arith.xori %87, %90 : vector<8x128xi1>
      %92 = arith.andi %91, %85 : vector<8x128xi1>
      %93 = vector.broadcast %81 : i32 to vector<8x128xi32>
      %94 = arith.addi %83, %93 : vector<8x128xi32>
      %95 = arith.select %92, %94, %83 : vector<8x128xi1>, vector<8x128xi32>
      %c0_i32_59 = arith.constant 0 : i32
      %96 = vector.broadcast %c0_i32_59 : i32 to vector<8x128xi32>
      %97 = arith.cmpi eq, %95, %96 : vector<8x128xi32>
      %98 = arith.select %97, %77, %74 : vector<8x128xi1>, vector<8x128xf32>
      %99 = arith.subf %73, %98 : vector<8x128xf32>
      %100 = arith.mulf %99, %99 : vector<8x128xf32>
      %cst = arith.constant 2.000000e-01 : f32
      %101 = vector.broadcast %cst : f32 to vector<8x128xf32>
      %102 = arith.addf %100, %101 : vector<8x128xf32>
      %cst_60 = arith.constant 1.000000e+00 : f32
      %103 = vector.broadcast %cst_60 : f32 to vector<8x128xf32>
      %104 = arith.divf %103, %102 : vector<8x128xf32>
      %cst_61 = arith.constant 6.250000e-02 : f32
      %cst_62 = arith.constant 1.875000e-01 : f32
      %105 = vector.broadcast %cst_61 : f32 to vector<8x128xf32>
      %106 = vector.broadcast %cst_62 : f32 to vector<8x128xf32>
      %107 = arith.select %97, %105, %106 : vector<8x128xi1>, vector<8x128xf32>
      %108 = arith.mulf %104, %107 : vector<8x128xf32>
      %109 = math.exp %108 : vector<8x128xf32>
      %110 = arith.subf %76, %98 : vector<8x128xf32>
      %111 = arith.mulf %110, %110 : vector<8x128xf32>
      %cst_63 = arith.constant 2.000000e-01 : f32
      %112 = vector.broadcast %cst_63 : f32 to vector<8x128xf32>
      %113 = arith.addf %111, %112 : vector<8x128xf32>
      %cst_64 = arith.constant 1.000000e+00 : f32
      %114 = vector.broadcast %cst_64 : f32 to vector<8x128xf32>
      %115 = arith.divf %114, %113 : vector<8x128xf32>
      %cst_65 = arith.constant 1.875000e-01 : f32
      %cst_66 = arith.constant 6.250000e-02 : f32
      %116 = vector.broadcast %cst_65 : f32 to vector<8x128xf32>
      %117 = vector.broadcast %cst_66 : f32 to vector<8x128xf32>
      %118 = arith.select %97, %116, %117 : vector<8x128xi1>, vector<8x128xf32>
      %119 = arith.mulf %115, %118 : vector<8x128xf32>
      %120 = math.exp %119 : vector<8x128xf32>
      %121 = arith.subf %74, %98 : vector<8x128xf32>
      %122 = arith.mulf %121, %121 : vector<8x128xf32>
      %cst_67 = arith.constant 2.000000e-01 : f32
      %123 = vector.broadcast %cst_67 : f32 to vector<8x128xf32>
      %124 = arith.addf %122, %123 : vector<8x128xf32>
      %cst_68 = arith.constant 1.000000e+00 : f32
      %125 = vector.broadcast %cst_68 : f32 to vector<8x128xf32>
      %126 = arith.divf %125, %124 : vector<8x128xf32>
      %cst_69 = arith.constant 1.875000e-01 : f32
      %cst_70 = arith.constant 5.625000e-01 : f32
      %127 = vector.broadcast %cst_69 : f32 to vector<8x128xf32>
      %128 = vector.broadcast %cst_70 : f32 to vector<8x128xf32>
      %129 = arith.select %97, %127, %128 : vector<8x128xi1>, vector<8x128xf32>
      %130 = arith.mulf %126, %129 : vector<8x128xf32>
      %131 = math.exp %130 : vector<8x128xf32>
      %132 = arith.subf %77, %98 : vector<8x128xf32>
      %133 = arith.mulf %132, %132 : vector<8x128xf32>
      %cst_71 = arith.constant 2.000000e-01 : f32
      %134 = vector.broadcast %cst_71 : f32 to vector<8x128xf32>
      %135 = arith.addf %133, %134 : vector<8x128xf32>
      %cst_72 = arith.constant 1.000000e+00 : f32
      %136 = vector.broadcast %cst_72 : f32 to vector<8x128xf32>
      %137 = arith.divf %136, %135 : vector<8x128xf32>
      %cst_73 = arith.constant 5.625000e-01 : f32
      %cst_74 = arith.constant 1.875000e-01 : f32
      %138 = vector.broadcast %cst_73 : f32 to vector<8x128xf32>
      %139 = vector.broadcast %cst_74 : f32 to vector<8x128xf32>
      %140 = arith.select %97, %138, %139 : vector<8x128xi1>, vector<8x128xf32>
      %141 = arith.mulf %137, %140 : vector<8x128xf32>
      %142 = math.exp %141 : vector<8x128xf32>
      %143 = arith.addf %109, %120 : vector<8x128xf32>
      %144 = arith.addf %143, %131 : vector<8x128xf32>
      %145 = arith.addf %144, %142 : vector<8x128xf32>
      %cst_75 = arith.constant 1.000000e+00 : f32
      %146 = vector.broadcast %cst_75 : f32 to vector<8x128xf32>
      %147 = arith.divf %146, %145 : vector<8x128xf32>
      %148 = arith.mulf %109, %147 : vector<8x128xf32>
      %c0_76 = arith.constant 0 : index
      %c0_77 = arith.constant 0 : index
      %c0_78 = arith.constant 0 : index
      %c0_79 = arith.constant 0 : index
      %149 = vector.load %arg8[%c0_76, %c0_77, %c0_78, %c0_79] : memref<2x4x8x128xf32, #tpu.memory_space<vmem>>, vector<1x1x8x128xf32>
      %150 = vector.shape_cast %149 : vector<1x1x8x128xf32> to vector<8x128xf32>
      %151 = vector.shape_cast %148 : vector<8x128xf32> to vector<1x1x8x128xf32>
      tpu.vector_store %arg8[%c0_76, %c0_77, %c0_78, %c0_79], %151 {strides = array<i32>} : memref<2x4x8x128xf32, #tpu.memory_space<vmem>>, vector<1x1x8x128xf32>,
      %152 = arith.mulf %120, %147 : vector<8x128xf32>
      %c0_80 = arith.constant 0 : index
      %c1_81 = arith.constant 1 : index
      %c0_82 = arith.constant 0 : index
      %c0_83 = arith.constant 0 : index
      %153 = vector.load %arg8[%c0_80, %c1_81, %c0_82, %c0_83] : memref<2x4x8x128xf32, #tpu.memory_space<vmem>>, vector<1x1x8x128xf32>
      %154 = vector.shape_cast %153 : vector<1x1x8x128xf32> to vector<8x128xf32>
      %155 = vector.shape_cast %152 : vector<8x128xf32> to vector<1x1x8x128xf32>
      tpu.vector_store %arg8[%c0_80, %c1_81, %c0_82, %c0_83], %155 {strides = array<i32>} : memref<2x4x8x128xf32, #tpu.memory_space<vmem>>, vector<1x1x8x128xf32>,
      %156 = arith.mulf %131, %147 : vector<8x128xf32>
      %c0_84 = arith.constant 0 : index
      %c2_85 = arith.constant 2 : index
      %c0_86 = arith.constant 0 : index
      %c0_87 = arith.constant 0 : index
      %157 = vector.load %arg8[%c0_84, %c2_85, %c0_86, %c0_87] : memref<2x4x8x128xf32, #tpu.memory_space<vmem>>, vector<1x1x8x128xf32>
      %158 = vector.shape_cast %157 : vector<1x1x8x128xf32> to vector<8x128xf32>
      %159 = vector.shape_cast %156 : vector<8x128xf32> to vector<1x1x8x128xf32>
      tpu.vector_store %arg8[%c0_84, %c2_85, %c0_86, %c0_87], %159 {strides = array<i32>} : memref<2x4x8x128xf32, #tpu.memory_space<vmem>>, vector<1x1x8x128xf32>,
      %160 = arith.mulf %142, %147 : vector<8x128xf32>
      %c0_88 = arith.constant 0 : index
      %c3_89 = arith.constant 3 : index
      %c0_90 = arith.constant 0 : index
      %c0_91 = arith.constant 0 : index
      %161 = vector.load %arg8[%c0_88, %c3_89, %c0_90, %c0_91] : memref<2x4x8x128xf32, #tpu.memory_space<vmem>>, vector<1x1x8x128xf32>
      %162 = vector.shape_cast %161 : vector<1x1x8x128xf32> to vector<8x128xf32>
      %163 = vector.shape_cast %160 : vector<8x128xf32> to vector<1x1x8x128xf32>
      tpu.vector_store %arg8[%c0_88, %c3_89, %c0_90, %c0_91], %163 {strides = array<i32>} : memref<2x4x8x128xf32, #tpu.memory_space<vmem>>, vector<1x1x8x128xf32>,
      %164 = arith.subf %74, %98 : vector<8x128xf32>
      %165 = arith.mulf %164, %164 : vector<8x128xf32>
      %cst_92 = arith.constant 2.000000e-01 : f32
      %166 = vector.broadcast %cst_92 : f32 to vector<8x128xf32>
      %167 = arith.addf %165, %166 : vector<8x128xf32>
      %cst_93 = arith.constant 1.000000e+00 : f32
      %168 = vector.broadcast %cst_93 : f32 to vector<8x128xf32>
      %169 = arith.divf %168, %167 : vector<8x128xf32>
      %cst_94 = arith.constant 1.875000e-01 : f32
      %cst_95 = arith.constant 5.625000e-01 : f32
      %170 = vector.broadcast %cst_94 : f32 to vector<8x128xf32>
      %171 = vector.broadcast %cst_95 : f32 to vector<8x128xf32>
      %172 = arith.select %97, %170, %171 : vector<8x128xi1>, vector<8x128xf32>
      %173 = arith.mulf %169, %172 : vector<8x128xf32>
      %174 = math.exp %173 : vector<8x128xf32>
      %175 = arith.subf %77, %98 : vector<8x128xf32>
      %176 = arith.mulf %175, %175 : vector<8x128xf32>
      %cst_96 = arith.constant 2.000000e-01 : f32
      %177 = vector.broadcast %cst_96 : f32 to vector<8x128xf32>
      %178 = arith.addf %176, %177 : vector<8x128xf32>
      %cst_97 = arith.constant 1.000000e+00 : f32
      %179 = vector.broadcast %cst_97 : f32 to vector<8x128xf32>
      %180 = arith.divf %179, %178 : vector<8x128xf32>
      %cst_98 = arith.constant 5.625000e-01 : f32
      %cst_99 = arith.constant 1.875000e-01 : f32
      %181 = vector.broadcast %cst_98 : f32 to vector<8x128xf32>
      %182 = vector.broadcast %cst_99 : f32 to vector<8x128xf32>
      %183 = arith.select %97, %181, %182 : vector<8x128xi1>, vector<8x128xf32>
      %184 = arith.mulf %180, %183 : vector<8x128xf32>
      %185 = math.exp %184 : vector<8x128xf32>
      %186 = arith.subf %75, %98 : vector<8x128xf32>
      %187 = arith.mulf %186, %186 : vector<8x128xf32>
      %cst_100 = arith.constant 2.000000e-01 : f32
      %188 = vector.broadcast %cst_100 : f32 to vector<8x128xf32>
      %189 = arith.addf %187, %188 : vector<8x128xf32>
      %cst_101 = arith.constant 1.000000e+00 : f32
      %190 = vector.broadcast %cst_101 : f32 to vector<8x128xf32>
      %191 = arith.divf %190, %189 : vector<8x128xf32>
      %cst_102 = arith.constant 6.250000e-02 : f32
      %cst_103 = arith.constant 1.875000e-01 : f32
      %192 = vector.broadcast %cst_102 : f32 to vector<8x128xf32>
      %193 = vector.broadcast %cst_103 : f32 to vector<8x128xf32>
      %194 = arith.select %97, %192, %193 : vector<8x128xi1>, vector<8x128xf32>
      %195 = arith.mulf %191, %194 : vector<8x128xf32>
      %196 = math.exp %195 : vector<8x128xf32>
      %197 = arith.subf %78, %98 : vector<8x128xf32>
      %198 = arith.mulf %197, %197 : vector<8x128xf32>
      %cst_104 = arith.constant 2.000000e-01 : f32
      %199 = vector.broadcast %cst_104 : f32 to vector<8x128xf32>
      %200 = arith.addf %198, %199 : vector<8x128xf32>
      %cst_105 = arith.constant 1.000000e+00 : f32
      %201 = vector.broadcast %cst_105 : f32 to vector<8x128xf32>
      %202 = arith.divf %201, %200 : vector<8x128xf32>
      %cst_106 = arith.constant 1.875000e-01 : f32
      %cst_107 = arith.constant 6.250000e-02 : f32
      %203 = vector.broadcast %cst_106 : f32 to vector<8x128xf32>
      %204 = vector.broadcast %cst_107 : f32 to vector<8x128xf32>
      %205 = arith.select %97, %203, %204 : vector<8x128xi1>, vector<8x128xf32>
      %206 = arith.mulf %202, %205 : vector<8x128xf32>
      %207 = math.exp %206 : vector<8x128xf32>
      %208 = arith.addf %174, %185 : vector<8x128xf32>
      %209 = arith.addf %208, %196 : vector<8x128xf32>
      %210 = arith.addf %209, %207 : vector<8x128xf32>
      %cst_108 = arith.constant 1.000000e+00 : f32
      %211 = vector.broadcast %cst_108 : f32 to vector<8x128xf32>
      %212 = arith.divf %211, %210 : vector<8x128xf32>
      %213 = arith.mulf %174, %212 : vector<8x128xf32>
      %c1_109 = arith.constant 1 : index
      %c0_110 = arith.constant 0 : index
      %c0_111 = arith.constant 0 : index
      %c0_112 = arith.constant 0 : index
      %214 = vector.load %arg8[%c1_109, %c0_110, %c0_111, %c0_112] : memref<2x4x8x128xf32, #tpu.memory_space<vmem>>, vector<1x1x8x128xf32>
      %215 = vector.shape_cast %214 : vector<1x1x8x128xf32> to vector<8x128xf32>
      %216 = vector.shape_cast %213 : vector<8x128xf32> to vector<1x1x8x128xf32>
      tpu.vector_store %arg8[%c1_109, %c0_110, %c0_111, %c0_112], %216 {strides = array<i32>} : memref<2x4x8x128xf32, #tpu.memory_space<vmem>>, vector<1x1x8x128xf32>,
      %217 = arith.mulf %185, %212 : vector<8x128xf32>
      %c1_113 = arith.constant 1 : index
      %c1_114 = arith.constant 1 : index
      %c0_115 = arith.constant 0 : index
      %c0_116 = arith.constant 0 : index
      %218 = vector.load %arg8[%c1_113, %c1_114, %c0_115, %c0_116] : memref<2x4x8x128xf32, #tpu.memory_space<vmem>>, vector<1x1x8x128xf32>
      %219 = vector.shape_cast %218 : vector<1x1x8x128xf32> to vector<8x128xf32>
      %220 = vector.shape_cast %217 : vector<8x128xf32> to vector<1x1x8x128xf32>
      tpu.vector_store %arg8[%c1_113, %c1_114, %c0_115, %c0_116], %220 {strides = array<i32>} : memref<2x4x8x128xf32, #tpu.memory_space<vmem>>, vector<1x1x8x128xf32>,
      %221 = arith.mulf %196, %212 : vector<8x128xf32>
      %c1_117 = arith.constant 1 : index
      %c2_118 = arith.constant 2 : index
      %c0_119 = arith.constant 0 : index
      %c0_120 = arith.constant 0 : index
      %222 = vector.load %arg8[%c1_117, %c2_118, %c0_119, %c0_120] : memref<2x4x8x128xf32, #tpu.memory_space<vmem>>, vector<1x1x8x128xf32>
      %223 = vector.shape_cast %222 : vector<1x1x8x128xf32> to vector<8x128xf32>
      %224 = vector.shape_cast %221 : vector<8x128xf32> to vector<1x1x8x128xf32>
      tpu.vector_store %arg8[%c1_117, %c2_118, %c0_119, %c0_120], %224 {strides = array<i32>} : memref<2x4x8x128xf32, #tpu.memory_space<vmem>>, vector<1x1x8x128xf32>,
      %225 = arith.mulf %207, %212 : vector<8x128xf32>
      %c1_121 = arith.constant 1 : index
      %c3_122 = arith.constant 3 : index
      %c0_123 = arith.constant 0 : index
      %c0_124 = arith.constant 0 : index
      %226 = vector.load %arg8[%c1_121, %c3_122, %c0_123, %c0_124] : memref<2x4x8x128xf32, #tpu.memory_space<vmem>>, vector<1x1x8x128xf32>
      %227 = vector.shape_cast %226 : vector<1x1x8x128xf32> to vector<8x128xf32>
      %228 = vector.shape_cast %225 : vector<8x128xf32> to vector<1x1x8x128xf32>
      tpu.vector_store %arg8[%c1_121, %c3_122, %c0_123, %c0_124], %228 {strides = array<i32>} : memref<2x4x8x128xf32, #tpu.memory_space<vmem>>, vector<1x1x8x128xf32>,
    } else {
    }
    %c0 = arith.constant 0 : index
    %c0_1 = arith.constant 0 : index
    %c0_2 = arith.constant 0 : index
    %c0_3 = arith.constant 0 : index
    %3 = vector.load %arg5[%c0, %c0_1, %c0_2, %c0_3] : memref<1x2x8x128xf32, #tpu.memory_space<vmem>>, vector<1x2x8x128xf32>
    %4 = vector.shape_cast %3 : vector<1x2x8x128xf32> to vector<2x8x128xf32>
    %c0_4 = arith.constant 0 : index
    %c0_5 = arith.constant 0 : index
    %c0_6 = arith.constant 0 : index
    %c0_7 = arith.constant 0 : index
    %5 = vector.load %arg6[%c0_4, %c0_5, %c0_6, %c0_7] : memref<1x2x8x128xf32, #tpu.memory_space<vmem>>, vector<1x2x8x128xf32>
    %6 = vector.shape_cast %5 : vector<1x2x8x128xf32> to vector<2x8x128xf32>
    %7 = tpu.concatenate %4, %6 in 1 : vector<2x8x128xf32>, vector<2x8x128xf32> -> vector<2x16x128xf32>
    %8 = vector.extract_strided_slice %7 {offsets = [0, 0, 0], sizes = [2, 8, 128], strides = [1, 1, 1]} : vector<2x16x128xf32> to vector<2x8x128xf32>
    %9 = vector.extract_strided_slice %7 {offsets = [0, 1, 0], sizes = [2, 8, 128], strides = [1, 1, 1]} : vector<2x16x128xf32> to vector<2x8x128xf32>
    %10 = vector.extract_strided_slice %7 {offsets = [0, 2, 0], sizes = [2, 8, 128], strides = [1, 1, 1]} : vector<2x16x128xf32> to vector<2x8x128xf32>
    %c126_i32 = arith.constant 126 : i32
    %11 = tpu.dynamic_rotate %8 by %c126_i32 dim 2 : vector<2x8x128xf32>, i32 -> vector<2x8x128xf32>
    %c126_i32_8 = arith.constant 126 : i32
    %12 = tpu.dynamic_rotate %9 by %c126_i32_8 dim 2 : vector<2x8x128xf32>, i32 -> vector<2x8x128xf32>
    %c126_i32_9 = arith.constant 126 : i32
    %13 = tpu.dynamic_rotate %10 by %c126_i32_9 dim 2 : vector<2x8x128xf32>, i32 -> vector<2x8x128xf32>
    %c0_10 = arith.constant 0 : index
    %c0_11 = arith.constant 0 : index
    %c0_12 = arith.constant 0 : index
    %c0_13 = arith.constant 0 : index
    %14 = vector.load %arg8[%c0_10, %c0_11, %c0_12, %c0_13] : memref<2x4x8x128xf32, #tpu.memory_space<vmem>>, vector<1x1x8x128xf32>
    %15 = vector.shape_cast %14 : vector<1x1x8x128xf32> to vector<8x128xf32>
    %16 = vector.shape_cast %15 : vector<8x128xf32> to vector<1x8x128xf32>
    %17 = vector.broadcast %16 : vector<1x8x128xf32> to vector<2x8x128xf32>
    %18 = arith.mulf %17, %8 : vector<2x8x128xf32>
    %c0_14 = arith.constant 0 : index
    %c1 = arith.constant 1 : index
    %c0_15 = arith.constant 0 : index
    %c0_16 = arith.constant 0 : index
    %19 = vector.load %arg8[%c0_14, %c1, %c0_15, %c0_16] : memref<2x4x8x128xf32, #tpu.memory_space<vmem>>, vector<1x1x8x128xf32>
    %20 = vector.shape_cast %19 : vector<1x1x8x128xf32> to vector<8x128xf32>
    %21 = vector.shape_cast %20 : vector<8x128xf32> to vector<1x8x128xf32>
    %22 = vector.broadcast %21 : vector<1x8x128xf32> to vector<2x8x128xf32>
    %23 = arith.mulf %22, %11 : vector<2x8x128xf32>
    %24 = arith.addf %18, %23 : vector<2x8x128xf32>
    %c0_17 = arith.constant 0 : index
    %c2 = arith.constant 2 : index
    %c0_18 = arith.constant 0 : index
    %c0_19 = arith.constant 0 : index
    %25 = vector.load %arg8[%c0_17, %c2, %c0_18, %c0_19] : memref<2x4x8x128xf32, #tpu.memory_space<vmem>>, vector<1x1x8x128xf32>
    %26 = vector.shape_cast %25 : vector<1x1x8x128xf32> to vector<8x128xf32>
    %27 = vector.shape_cast %26 : vector<8x128xf32> to vector<1x8x128xf32>
    %28 = vector.broadcast %27 : vector<1x8x128xf32> to vector<2x8x128xf32>
    %29 = arith.mulf %28, %9 : vector<2x8x128xf32>
    %30 = arith.addf %24, %29 : vector<2x8x128xf32>
    %c0_20 = arith.constant 0 : index
    %c3 = arith.constant 3 : index
    %c0_21 = arith.constant 0 : index
    %c0_22 = arith.constant 0 : index
    %31 = vector.load %arg8[%c0_20, %c3, %c0_21, %c0_22] : memref<2x4x8x128xf32, #tpu.memory_space<vmem>>, vector<1x1x8x128xf32>
    %32 = vector.shape_cast %31 : vector<1x1x8x128xf32> to vector<8x128xf32>
    %33 = vector.shape_cast %32 : vector<8x128xf32> to vector<1x8x128xf32>
    %34 = vector.broadcast %33 : vector<1x8x128xf32> to vector<2x8x128xf32>
    %35 = arith.mulf %34, %12 : vector<2x8x128xf32>
    %36 = arith.addf %30, %35 : vector<2x8x128xf32>
    %37 = vector.extract_strided_slice %36 {offsets = [0, 0, 0], sizes = [2, 8, 32], strides = [1, 1, 1]} : vector<2x8x128xf32> to vector<2x8x32xf32>
    %c0_23 = arith.constant 0 : index
    %c0_24 = arith.constant 0 : index
    %c0_25 = arith.constant 0 : index
    %c0_26 = arith.constant 0 : index
    %38 = vector.load %arg7[%c0_23, %c0_24, %c0_25, %c0_26] : memref<1x2x8x64xf32, #tpu.memory_space<vmem>>, vector<1x2x8x32xf32>
    %39 = vector.shape_cast %38 : vector<1x2x8x32xf32> to vector<2x8x32xf32>
    %40 = vector.shape_cast %37 : vector<2x8x32xf32> to vector<1x2x8x32xf32>
    tpu.vector_store %arg7[%c0_23, %c0_24, %c0_25, %c0_26], %40 {strides = array<i32>} : memref<1x2x8x64xf32, #tpu.memory_space<vmem>>, vector<1x2x8x32xf32>,
    %c1_27 = arith.constant 1 : index
    %c0_28 = arith.constant 0 : index
    %c0_29 = arith.constant 0 : index
    %c0_30 = arith.constant 0 : index
    %41 = vector.load %arg8[%c1_27, %c0_28, %c0_29, %c0_30] : memref<2x4x8x128xf32, #tpu.memory_space<vmem>>, vector<1x1x8x128xf32>
    %42 = vector.shape_cast %41 : vector<1x1x8x128xf32> to vector<8x128xf32>
    %43 = vector.shape_cast %42 : vector<8x128xf32> to vector<1x8x128xf32>
    %44 = vector.broadcast %43 : vector<1x8x128xf32> to vector<2x8x128xf32>
    %45 = arith.mulf %44, %9 : vector<2x8x128xf32>
    %c1_31 = arith.constant 1 : index
    %c1_32 = arith.constant 1 : index
    %c0_33 = arith.constant 0 : index
    %c0_34 = arith.constant 0 : index
    %46 = vector.load %arg8[%c1_31, %c1_32, %c0_33, %c0_34] : memref<2x4x8x128xf32, #tpu.memory_space<vmem>>, vector<1x1x8x128xf32>
    %47 = vector.shape_cast %46 : vector<1x1x8x128xf32> to vector<8x128xf32>
    %48 = vector.shape_cast %47 : vector<8x128xf32> to vector<1x8x128xf32>
    %49 = vector.broadcast %48 : vector<1x8x128xf32> to vector<2x8x128xf32>
    %50 = arith.mulf %49, %12 : vector<2x8x128xf32>
    %51 = arith.addf %45, %50 : vector<2x8x128xf32>
    %c1_35 = arith.constant 1 : index
    %c2_36 = arith.constant 2 : index
    %c0_37 = arith.constant 0 : index
    %c0_38 = arith.constant 0 : index
    %52 = vector.load %arg8[%c1_35, %c2_36, %c0_37, %c0_38] : memref<2x4x8x128xf32, #tpu.memory_space<vmem>>, vector<1x1x8x128xf32>
    %53 = vector.shape_cast %52 : vector<1x1x8x128xf32> to vector<8x128xf32>
    %54 = vector.shape_cast %53 : vector<8x128xf32> to vector<1x8x128xf32>
    %55 = vector.broadcast %54 : vector<1x8x128xf32> to vector<2x8x128xf32>
    %56 = arith.mulf %55, %10 : vector<2x8x128xf32>
    %57 = arith.addf %51, %56 : vector<2x8x128xf32>
    %c1_39 = arith.constant 1 : index
    %c3_40 = arith.constant 3 : index
    %c0_41 = arith.constant 0 : index
    %c0_42 = arith.constant 0 : index
    %58 = vector.load %arg8[%c1_39, %c3_40, %c0_41, %c0_42] : memref<2x4x8x128xf32, #tpu.memory_space<vmem>>, vector<1x1x8x128xf32>
    %59 = vector.shape_cast %58 : vector<1x1x8x128xf32> to vector<8x128xf32>
    %60 = vector.shape_cast %59 : vector<8x128xf32> to vector<1x8x128xf32>
    %61 = vector.broadcast %60 : vector<1x8x128xf32> to vector<2x8x128xf32>
    %62 = arith.mulf %61, %13 : vector<2x8x128xf32>
    %63 = arith.addf %57, %62 : vector<2x8x128xf32>
    %64 = vector.extract_strided_slice %63 {offsets = [0, 0, 0], sizes = [2, 8, 32], strides = [1, 1, 1]} : vector<2x8x128xf32> to vector<2x8x32xf32>
    %c0_43 = arith.constant 0 : index
    %c0_44 = arith.constant 0 : index
    %c0_45 = arith.constant 0 : index
    %c32 = arith.constant 32 : index
    %65 = vector.load %arg7[%c0_43, %c0_44, %c0_45, %c32] : memref<1x2x8x64xf32, #tpu.memory_space<vmem>>, vector<1x2x8x32xf32>
    %66 = vector.shape_cast %65 : vector<1x2x8x32xf32> to vector<2x8x32xf32>
    %67 = vector.shape_cast %64 : vector<2x8x32xf32> to vector<1x2x8x32xf32>
    tpu.vector_store %arg7[%c0_43, %c0_44, %c0_45, %c32], %67 {strides = array<i32>} : memref<1x2x8x64xf32, #tpu.memory_space<vmem>>, vector<1x2x8x32xf32>,
    return
  }
  func.func @transform_0(%arg0: i32, %arg1: i32, %arg2: i32) -> (i32, i32, i32) {
    %c0_i32 = arith.constant 0 : i32
    %c0_i32_0 = arith.constant 0 : i32
    return %arg0, %arg1, %c0_i32 : i32, i32, i32
  }
  func.func @transform_1(%arg0: i32, %arg1: i32, %arg2: i32) -> (i32, i32, i32) {
    %c1_i32 = arith.constant 1 : i32
    %0 = arith.addi %arg1, %c1_i32 : i32
    %c1_i32_0 = arith.constant 1 : i32
    %1 = arith.muli %0, %c1_i32_0 : i32
    %c0_i32 = arith.constant 0 : i32
    %c0_i32_1 = arith.constant 0 : i32
    return %arg0, %1, %c0_i32 : i32, i32, i32
  }
  func.func @transform_2(%arg0: i32, %arg1: i32, %arg2: i32) -> (i32, i32, i32, i32) {
    %c0_i32 = arith.constant 0 : i32
    %c0_i32_0 = arith.constant 0 : i32
    return %arg0, %arg2, %arg1, %c0_i32 : i32, i32, i32, i32
  }
  func.func @transform_3(%arg0: i32, %arg1: i32, %arg2: i32) -> (i32, i32, i32, i32) {
    %c1_i32 = arith.constant 1 : i32
    %0 = arith.addi %arg1, %c1_i32 : i32
    %c1_i32_0 = arith.constant 1 : i32
    %1 = arith.muli %0, %c1_i32_0 : i32
    %c0_i32 = arith.constant 0 : i32
    %c0_i32_1 = arith.constant 0 : i32
    return %arg0, %arg2, %1, %c0_i32 : i32, i32, i32, i32
  }
  func.func @transform_4(%arg0: i32, %arg1: i32, %arg2: i32) -> (i32, i32, i32, i32) {
    %c0_i32 = arith.constant 0 : i32
    %c0_i32_0 = arith.constant 0 : i32
    return %arg0, %arg2, %arg1, %c0_i32 : i32, i32, i32, i32
  }
}

</mosaic_0001>

<llo_original>
// kernel: gg_bilinear.1
$region0: #{gg_bilinear.1}
  #allocation0 [shape = 'u32[]', space=smem, size = 0x4, offset = 0x4, fixed_abs, tag = 'smem constant byte address 0x4 - core index']
  #allocation1 [shape = 'u32[144,128]{1,0:T(1,128)}', space=vmem, size = 0x12000, scoped, tag = 'internal scratch']
  #allocation2 [shape = 'f32[2,4,8,128]{3,2,1,0:T(8,128)}', space=vmem, size = 0x8000, scoped, tag = 'scratch operand']
  %s0 = inlined_call_operand.vmem [shape: f32[2,24,128], index: 0, kind: input, shape index: {}, may-alias: {0,1}]
  %s1 = inlined_call_operand.vmem [shape: f32[2,24,128], index: 1, kind: input, shape index: {}, may-alias: {0,1}]
  %s2 = inlined_call_operand.vmem [shape: f32[2,4,24,128], index: 2, kind: input, shape index: {}, may-alias: {2,3}]
  %s3 = inlined_call_operand.vmem [shape: f32[2,4,24,128], index: 3, kind: input, shape index: {}, may-alias: {2,3}]
  %s4 = inlined_call_operand.vmem [shape: f32[2,4,16,64], index: 4, kind: output, shape index: {}]
  %s5 = sld [smem:[#allocation0]]
  $region163: #{gg_bilinear.1} parent=0
    _
  %s7 = ssub.s32 1, %s5
  %s8 = scalar_select 0, %s7, %s5
  $region1: #{gg_bilinear.1} parent=0
    #allocation3 [shape = 'u8[16384]{0}', space=vmem, size = 0x4000, scoped, tag = 'input window, operand 2']
    #allocation4 [shape = 'u8[16384]{0}', space=vmem, size = 0x4000, scoped, tag = 'input window, operand 3']
    #allocation5 [shape = 'u8[16384]{0}', space=vmem, size = 0x4000, scoped, tag = 'output window, operand 0']
    loop: start=0, step=1, limit=10
    $region2: #{gg_bilinear.1} parent=1 // loop_pre_header
      _
    $region3: #{gg_bilinear.1} parent=1 // loop_header
      %s10 = sphi 0, %s14
      %p11 = scmp.ge.s32.totalorder %s10, 10
      %s17 = sphi 0, %s36
      %s18 = sphi 0, %s32
      %s19 = sphi 0, %s28
      %s20 = sphi 0, %s17
      %s21 = sphi 0, %s18
      %s22 = sphi 0, %s19
      %s23 = sphi 0, %s20
      %s24 = sphi 0, %s21
      %s25 = sphi 0, %s22
      %s41 = sphi 0, %s43
      %s44 = sphi 0, %s41
      %s45 = sphi 0, %s44
      %s61 = sphi 0, %s45
      %s71 = sphi 0, %s73
      %s74 = sphi 0, %s71
      %s75 = sphi 0, %s74
      %s91 = sphi 0, %s75
      %s101 = sphi 0, %s103
      %s104 = sphi 0, %s101
      %s105 = sphi 0, %s104
      %s121 = sphi 0, %s105
      %s133 = sphi 0, %s135
      %s136 = sphi 0, %s133
      %s137 = sphi 0, %s136
      %s153 = sphi 0, %s137
      %s163 = sphi 0, %s165
      %s166 = sphi 0, %s163
      %s167 = sphi 0, %s166
      %s183 = sphi 0, %s167
    $region4: #{gg_bilinear.1} parent=1 // loop_header_branch
      %13 = sbr.rel (%p11) target = $region8
    $region5: #{gg_bilinear.1} parent=1 // loop_body
      %s15 = ssub.s32 %s10, 1
      %s16 = ssub.s32 %s10, 2
      %s26 = sadd.s32 1, %s19
      %p27 = scmp.ge.s32.totalorder %s26, 2
      %s28 = scalar_select %p27, 0, %s26
      %s29 = sadd.s32 1, %s18
      %s30 = scalar_select %p27, %s29, %s18
      %p31 = scmp.ge.s32.totalorder %s30, 2
      %s32 = scalar_select %p31, 0, %s30
      %s33 = sadd.s32 1, %s17
      %s34 = scalar_select %p31, %s33, %s17
      %p35 = scmp.ge.s32.totalorder %s34, 2
      %s36 = scalar_select %p35, 0, %s34
      %s37 = ssub.s32 %s17, %s36
      %s38 = ssub.s32 %s18, %s32
      %s39 = sor.u32 %s37, %s38
      %p40 = scmp.eq.s32.totalorder %s39, 0
      %s42 = sadd.s32 %s41, 1
      %s43 = scalar_select %p40, %s41, %s42
      %p46 = pneg %p40
      %p47 = scmp.eq.s32.totalorder %s10, 7
      %p48 = por %p46, %p47
      %p49 = scmp.ne.s32.totalorder %s41, %s44
      %p50 = scmp.eq.s32.totalorder %s10, 0
      %p51 = por %p49, %p50
      %p52 = scmp.ne.s32.totalorder %s41, %s44
      %p53 = scmp.eq.s32.totalorder %s15, 7
      %p54 = por %p52, %p53
      %p55 = scmp.ne.s32.totalorder %s44, %s45
      %p56 = scmp.eq.s32.totalorder %s15, 0
      %p57 = por %p55, %p56
      %p58 = scmp.ne.s32.totalorder %s44, %s45
      %p59 = scmp.eq.s32.totalorder %s16, 7
      %p60 = por %p58, %p59
      %p62 = scmp.ne.s32.totalorder %s45, %s61
      %p63 = scmp.eq.s32.totalorder %s16, 0
      %p64 = por %p62, %p63
      %s65 = sadd.s32 %s18, 1
      %s66 = sadd.s32 %s32, 1
      %s67 = ssub.s32 %s17, %s36
      %s68 = ssub.s32 %s65, %s66
      %s69 = sor.u32 %s67, %s68
      %p70 = scmp.eq.s32.totalorder %s69, 0
      %s72 = sadd.s32 %s71, 1
      %s73 = scalar_select %p70, %s71, %s72
      %p76 = pneg %p70
      %p77 = scmp.eq.s32.totalorder %s10, 7
      %p78 = por %p76, %p77
      %p79 = scmp.ne.s32.totalorder %s71, %s74
      %p80 = scmp.eq.s32.totalorder %s10, 0
      %p81 = por %p79, %p80
      %p82 = scmp.ne.s32.totalorder %s71, %s74
      %p83 = scmp.eq.s32.totalorder %s15, 7
      %p84 = por %p82, %p83
      %p85 = scmp.ne.s32.totalorder %s74, %s75
      %p86 = scmp.eq.s32.totalorder %s15, 0
      %p87 = por %p85, %p86
      %p88 = scmp.ne.s32.totalorder %s74, %s75
      %p89 = scmp.eq.s32.totalorder %s16, 7
      %p90 = por %p88, %p89
      %p92 = scmp.ne.s32.totalorder %s75, %s91
      %p93 = scmp.eq.s32.totalorder %s16, 0
      %p94 = por %p92, %p93
      %s95 = ssub.s32 %s17, %s36
      %s96 = ssub.s32 %s19, %s28
      %s97 = sor.u32 %s95, %s96
      %s98 = ssub.s32 %s18, %s32
      %s99 = sor.u32 %s97, %s98
      %p100 = scmp.eq.s32.totalorder %s99, 0
      %s102 = sadd.s32 %s101, 1
      %s103 = scalar_select %p100, %s101, %s102
      %p106 = pneg %p100
      %p107 = scmp.eq.s32.totalorder %s10, 7
      %p108 = por %p106, %p107
      %p109 = scmp.ne.s32.totalorder %s101, %s104
      %p110 = scmp.eq.s32.totalorder %s10, 0
      %p111 = por %p109, %p110
      %p112 = scmp.ne.s32.totalorder %s101, %s104
      %p113 = scmp.eq.s32.totalorder %s15, 7
      %p114 = por %p112, %p113
      %p115 = scmp.ne.s32.totalorder %s104, %s105
      %p116 = scmp.eq.s32.totalorder %s15, 0
      %p117 = por %p115, %p116
      %p118 = scmp.ne.s32.totalorder %s104, %s105
      %p119 = scmp.eq.s32.totalorder %s16, 7
      %p120 = por %p118, %p119
      %p122 = scmp.ne.s32.totalorder %s105, %s121
      %p123 = scmp.eq.s32.totalorder %s16, 0
      %p124 = por %p122, %p123
      %s125 = sadd.s32 %s18, 1
      %s126 = sadd.s32 %s32, 1
      %s127 = ssub.s32 %s17, %s36
      %s128 = ssub.s32 %s19, %s28
      %s129 = sor.u32 %s127, %s128
      %s130 = ssub.s32 %s125, %s126
      %s131 = sor.u32 %s129, %s130
      %p132 = scmp.eq.s32.totalorder %s131, 0
      %s134 = sadd.s32 %s133, 1
      %s135 = scalar_select %p132, %s133, %s134
      %p138 = pneg %p132
      %p139 = scmp.eq.s32.totalorder %s10, 7
      %p140 = por %p138, %p139
      %p141 = scmp.ne.s32.totalorder %s133, %s136
      %p142 = scmp.eq.s32.totalorder %s10, 0
      %p143 = por %p141, %p142
      %p144 = scmp.ne.s32.totalorder %s133, %s136
      %p145 = scmp.eq.s32.totalorder %s15, 7
      %p146 = por %p144, %p145
      %p147 = scmp.ne.s32.totalorder %s136, %s137
      %p148 = scmp.eq.s32.totalorder %s15, 0
      %p149 = por %p147, %p148
      %p150 = scmp.ne.s32.totalorder %s136, %s137
      %p151 = scmp.eq.s32.totalorder %s16, 7
      %p152 = por %p150, %p151
      %p154 = scmp.ne.s32.totalorder %s137, %s153
      %p155 = scmp.eq.s32.totalorder %s16, 0
      %p156 = por %p154, %p155
      %s157 = ssub.s32 %s17, %s36
      %s158 = ssub.s32 %s19, %s28
      %s159 = sor.u32 %s157, %s158
      %s160 = ssub.s32 %s18, %s32
      %s161 = sor.u32 %s159, %s160
      %p162 = scmp.eq.s32.totalorder %s161, 0
      %s164 = sadd.s32 %s163, 1
      %s165 = scalar_select %p162, %s163, %s164
      %p168 = pneg %p162
      %p169 = scmp.eq.s32.totalorder %s10, 7
      %p170 = por %p168, %p169
      %p171 = scmp.ne.s32.totalorder %s163, %s166
      %p172 = scmp.eq.s32.totalorder %s10, 0
      %p173 = por %p171, %p172
      %p174 = scmp.ne.s32.totalorder %s163, %s166
      %p175 = scmp.eq.s32.totalorder %s15, 7
      %p176 = por %p174, %p175
      %p177 = scmp.ne.s32.totalorder %s166, %s167
      %p178 = scmp.eq.s32.totalorder %s15, 0
      %p179 = por %p177, %p178
      %p180 = scmp.ne.s32.totalorder %s166, %s167
      %p181 = scmp.eq.s32.totalorder %s16, 7
      %p182 = por %p180, %p181
      %p184 = scmp.ne.s32.totalorder %s167, %s183
      %p185 = scmp.eq.s32.totalorder %s16, 0
      %p186 = por %p184, %p185
      %p187 = scmp.le.s32.totalorder 1, %s10
      %p188 = scmp.lt.s32.totalorder %s10, 9
      %p189 = pnand %p187, %p188
      %p190 = pneg %p189
      // Predicated region
      $region9: #{gg_bilinear.1} parent=5 // pred_check
        _
      $region10: #{gg_bilinear.1} parent=5 // pred_check_branch
        %192 = sbr.rel (%p189) target = $region12
      $region11: #{gg_bilinear.1} parent=5 // pred_region
        %s193 = ssub.s32 %s10, 1
      $region12: #{gg_bilinear.1} parent=5 // pred_fallthru
        _
      %p194 = scmp.lt.s32.totalorder %s10, 8
      // Predicated region
      $region13: #{gg_bilinear.1} parent=5 // pred_check
        %p195 = pneg %p194
      $region14: #{gg_bilinear.1} parent=5 // pred_check_branch
        %197 = sbr.rel (%p195) target = $region16
      $region15: #{gg_bilinear.1} parent=5 // pred_region
        // Predicated region
        $region17: #{gg_bilinear.1} parent=15 // pred_check
          %p198 = pneg %p51
        $region18: #{gg_bilinear.1} parent=15 // pred_check_branch
          %200 = sbr.rel (%p198) target = $region20
        $region19: #{gg_bilinear.1} parent=15 // pred_region
          %p201 = scmp.lt.s32.totalorder %s17, 1
          %s202 = scalar_select %p201, %s17, 1
          %p203 = scmp.lt.s32.totalorder %s18, 2
          %s204 = scalar_select %p203, %s18, 2
          %s205 = smul.addr %s202, 3
          %s206 = sadd.s32 %s204, %s205
          %s207 = smul.addr %s206, 8
          %s208 = scalar_lea.vmem %s0, %s207
        $region20: #{gg_bilinear.1} parent=15 // pred_fallthru
          _
        // Predicated region
        $region21: #{gg_bilinear.1} parent=15 // pred_check
          %p209 = pneg %p81
        $region22: #{gg_bilinear.1} parent=15 // pred_check_branch
          %211 = sbr.rel (%p209) target = $region24
        $region23: #{gg_bilinear.1} parent=15 // pred_region
          %s212 = sadd.s32 %s18, 1
          %p213 = scmp.lt.s32.totalorder %s17, 1
          %s214 = scalar_select %p213, %s17, 1
          %p215 = scmp.lt.s32.totalorder %s212, 2
          %s216 = scalar_select %p215, %s212, 2
          %s217 = smul.addr %s214, 3
          %s218 = sadd.s32 %s216, %s217
          %s219 = smul.addr %s218, 8
          %s220 = scalar_lea.vmem %s1, %s219
          %s221 = sadd.s32 %s18, 1
        $region24: #{gg_bilinear.1} parent=15 // pred_fallthru
          _
        // Predicated region
        $region25: #{gg_bilinear.1} parent=15 // pred_check
          %p222 = pneg %p111
        $region26: #{gg_bilinear.1} parent=15 // pred_check_branch
          %224 = sbr.rel (%p222) target = $region28
        $region27: #{gg_bilinear.1} parent=15 // pred_region
          %s225 = sand.u32 %s101, 1
          %s226 = sand.u32 %s101, 1
          %s227 = smul.addr %s226, 16
          %s228 = scalar_lea.vmem [#allocation3], %s227
          %s229 = smul.u32 2, %s19
          %s230 = smul.addr %s229, 3
          %s231 = sadd.s32 %s18, %s230
          %s232 = smul.addr %s17, 12
          %s233 = sadd.s32 %s231, %s232
          %s234 = smul.addr %s233, 8
          %s235 = scalar_lea.vmem %s2, %s234
          // Predicated region
          $region29: #{gg_bilinear.1} parent=27 // pred_check
            _
          $region30: #{gg_bilinear.1} parent=27 // pred_check_branch
            %237 = sbr.rel (0) target = $region32
          $region31: #{gg_bilinear.1} parent=27 // pred_region
            // Predicated region
            $region33: #{gg_bilinear.1} parent=31 // pred_check
              _
            $region34: #{gg_bilinear.1} parent=31 // pred_check_branch
              %239 = sbr.rel (0) target = $region36
            $region35: #{gg_bilinear.1} parent=31 // pred_region
              // Predicated region
              $region48: #{gg_bilinear.1} parent=35 // pred_check
                _
              $region49: #{gg_bilinear.1} parent=35 // pred_check_branch
                %257 = sbr.rel (0) target = $region51
              $region50: #{gg_bilinear.1} parent=35 // pred_region
                loop: start=0, step=1, limit=1
                $region52: #{gg_bilinear.1} parent=50 // loop_pre_header
                  _
                $region53: #{gg_bilinear.1} parent=50 // loop_header
                  %s259 = sphi 0, %s263
                  %p260 = scmp.ge.s32.totalorder %s259, 1
                  %s264 = sphi %s235, %s235
                  %s265 = sphi %s228, %s228
                $region54: #{gg_bilinear.1} parent=50 // loop_header_branch
                  %262 = sbr.rel (%p260) target = $region58
                $region55: #{gg_bilinear.1} parent=50 // loop_body
                  %v266 = vld [vmem:[%s264] sm:$0xff]
                  %267 = vst [vmem:[%s265] sm:$0xff] %v266
                  %v268 = vld [vmem:[%s264 + $0x18] sm:$0xff]
                  %269 = vst [vmem:[%s265 + $0x8] sm:$0xff] %v268
                $region56: #{gg_bilinear.1} parent=50 // loop_footer
                  %s263 = sadd.s32 1, %s259
                $region57: #{gg_bilinear.1} parent=50 // loop_footer_branch
                  %258 = sbr.rel target = $region53
                $region58: #{gg_bilinear.1} parent=50 // loop_exit
                  _
              $region51: #{gg_bilinear.1} parent=35 // pred_fallthru
                _
              // Predicated region
              $region59: #{gg_bilinear.1} parent=35 // pred_check
                _
              $region60: #{gg_bilinear.1} parent=35 // pred_check_branch
                %271 = sbr.rel target = $region62
              $region61: #{gg_bilinear.1} parent=35 // pred_region
                _
              $region62: #{gg_bilinear.1} parent=35 // pred_fallthru
                _
            $region36: #{gg_bilinear.1} parent=31 // pred_fallthru
              _
            // Predicated region
            $region37: #{gg_bilinear.1} parent=31 // pred_check
              _
            $region38: #{gg_bilinear.1} parent=31 // pred_check_branch
              %241 = sbr.rel target = $region40
            $region39: #{gg_bilinear.1} parent=31 // pred_region
              %s243 = ssub.s32 256, 1
              loop: start=0, step=1, limit=1
              $region41: #{gg_bilinear.1} parent=39 // loop_pre_header
                _
              $region42: #{gg_bilinear.1} parent=39 // loop_header
                %s245 = sphi 0, %s249
                %p246 = scmp.ge.s32.totalorder %s245, 1
                %s250 = sphi %s235, %s235
                %s251 = sphi %s228, %s228
              $region43: #{gg_bilinear.1} parent=39 // loop_header_branch
                %248 = sbr.rel (%p246) target = $region47
              $region44: #{gg_bilinear.1} parent=39 // loop_body
                %v252 = vld [vmem:[%s250] sm:%s243]
                %253 = vst [vmem:[%s251] sm:%s243] %v252
                %v254 = vld [vmem:[%s250 + $0x18] sm:%s243]
                %255 = vst [vmem:[%s251 + $0x8] sm:%s243] %v254
              $region45: #{gg_bilinear.1} parent=39 // loop_footer
                %s249 = sadd.s32 1, %s245
              $region46: #{gg_bilinear.1} parent=39 // loop_footer_branch
                %244 = sbr.rel target = $region42
              $region47: #{gg_bilinear.1} parent=39 // loop_exit
                _
            $region40: #{gg_bilinear.1} parent=31 // pred_fallthru
              _
          $region32: #{gg_bilinear.1} parent=27 // pred_fallthru
            _
          %272 = vnop
        $region28: #{gg_bilinear.1} parent=15 // pred_fallthru
          _
        // Predicated region
        $region63: #{gg_bilinear.1} parent=15 // pred_check
          %p273 = pneg %p143
        $region64: #{gg_bilinear.1} parent=15 // pred_check_branch
          %275 = sbr.rel (%p273) target = $region66
        $region65: #{gg_bilinear.1} parent=15 // pred_region
          %s276 = sand.u32 %s133, 1
          %s277 = sand.u32 %s133, 1
          %s278 = smul.addr %s277, 16
          %s279 = scalar_lea.vmem [#allocation4], %s278
          %s280 = sadd.s32 %s18, 1
          %s281 = smul.u32 2, %s19
          %s282 = smul.addr %s281, 3
          %s283 = sadd.s32 %s280, %s282
          %s284 = smul.addr %s17, 12
          %s285 = sadd.s32 %s283, %s284
          %s286 = smul.addr %s285, 8
          %s287 = scalar_lea.vmem %s3, %s286
          // Predicated region
          $region67: #{gg_bilinear.1} parent=65 // pred_check
            _
          $region68: #{gg_bilinear.1} parent=65 // pred_check_branch
            %289 = sbr.rel (0) target = $region70
          $region69: #{gg_bilinear.1} parent=65 // pred_region
            // Predicated region
            $region71: #{gg_bilinear.1} parent=69 // pred_check
              _
            $region72: #{gg_bilinear.1} parent=69 // pred_check_branch
              %291 = sbr.rel (0) target = $region74
            $region73: #{gg_bilinear.1} parent=69 // pred_region
              // Predicated region
              $region86: #{gg_bilinear.1} parent=73 // pred_check
                _
              $region87: #{gg_bilinear.1} parent=73 // pred_check_branch
                %309 = sbr.rel (0) target = $region89
              $region88: #{gg_bilinear.1} parent=73 // pred_region
                loop: start=0, step=1, limit=1
                $region90: #{gg_bilinear.1} parent=88 // loop_pre_header
                  _
                $region91: #{gg_bilinear.1} parent=88 // loop_header
                  %s311 = sphi 0, %s315
                  %p312 = scmp.ge.s32.totalorder %s311, 1
                  %s316 = sphi %s287, %s287
                  %s317 = sphi %s279, %s279
                $region92: #{gg_bilinear.1} parent=88 // loop_header_branch
                  %314 = sbr.rel (%p312) target = $region96
                $region93: #{gg_bilinear.1} parent=88 // loop_body
                  %v318 = vld [vmem:[%s316] sm:$0xff]
                  %319 = vst [vmem:[%s317] sm:$0xff] %v318
                  %v320 = vld [vmem:[%s316 + $0x18] sm:$0xff]
                  %321 = vst [vmem:[%s317 + $0x8] sm:$0xff] %v320
                $region94: #{gg_bilinear.1} parent=88 // loop_footer
                  %s315 = sadd.s32 1, %s311
                $region95: #{gg_bilinear.1} parent=88 // loop_footer_branch
                  %310 = sbr.rel target = $region91
                $region96: #{gg_bilinear.1} parent=88 // loop_exit
                  _
              $region89: #{gg_bilinear.1} parent=73 // pred_fallthru
                _
              // Predicated region
              $region97: #{gg_bilinear.1} parent=73 // pred_check
                _
              $region98: #{gg_bilinear.1} parent=73 // pred_check_branch
                %323 = sbr.rel target = $region100
              $region99: #{gg_bilinear.1} parent=73 // pred_region
                _
              $region100: #{gg_bilinear.1} parent=73 // pred_fallthru
                _
            $region74: #{gg_bilinear.1} parent=69 // pred_fallthru
              _
            // Predicated region
            $region75: #{gg_bilinear.1} parent=69 // pred_check
              _
            $region76: #{gg_bilinear.1} parent=69 // pred_check_branch
              %293 = sbr.rel target = $region78
            $region77: #{gg_bilinear.1} parent=69 // pred_region
              %s295 = ssub.s32 256, 1
              loop: start=0, step=1, limit=1
              $region79: #{gg_bilinear.1} parent=77 // loop_pre_header
                _
              $region80: #{gg_bilinear.1} parent=77 // loop_header
                %s297 = sphi 0, %s301
                %p298 = scmp.ge.s32.totalorder %s297, 1
                %s302 = sphi %s287, %s287
                %s303 = sphi %s279, %s279
              $region81: #{gg_bilinear.1} parent=77 // loop_header_branch
                %300 = sbr.rel (%p298) target = $region85
              $region82: #{gg_bilinear.1} parent=77 // loop_body
                %v304 = vld [vmem:[%s302] sm:%s295]
                %305 = vst [vmem:[%s303] sm:%s295] %v304
                %v306 = vld [vmem:[%s302 + $0x18] sm:%s295]
                %307 = vst [vmem:[%s303 + $0x8] sm:%s295] %v306
              $region83: #{gg_bilinear.1} parent=77 // loop_footer
                %s301 = sadd.s32 1, %s297
              $region84: #{gg_bilinear.1} parent=77 // loop_footer_branch
                %296 = sbr.rel target = $region80
              $region85: #{gg_bilinear.1} parent=77 // loop_exit
                _
            $region78: #{gg_bilinear.1} parent=69 // pred_fallthru
              _
          $region70: #{gg_bilinear.1} parent=65 // pred_fallthru
            _
          %324 = vnop
        $region66: #{gg_bilinear.1} parent=15 // pred_fallthru
          _
      $region16: #{gg_bilinear.1} parent=5 // pred_fallthru
        _
      %p325 = scmp.le.s32.totalorder 1, %s10
      %p326 = scmp.lt.s32.totalorder %s10, 9
      %p327 = pnand %p325, %p326
      %p328 = pneg %p327
      // Predicated region
      $region101: #{gg_bilinear.1} parent=5 // pred_check
        _
      $region102: #{gg_bilinear.1} parent=5 // pred_check_branch
        %330 = sbr.rel (%p327) target = $region104
      $region103: #{gg_bilinear.1} parent=5 // pred_region
        %s331 = ssub.s32 %s10, 1
        %s332 = sand.u32 %s104, 1
        %s333 = sand.u32 %s104, 1
        %s334 = smul.addr %s333, 16
        %s335 = scalar_lea.vmem [#allocation3], %s334
        // Predicated region
        $region105: #{gg_bilinear.1} parent=103 // pred_check
          %p336 = pneg %p117
        $region106: #{gg_bilinear.1} parent=103 // pred_check_branch
          %338 = sbr.rel (%p336) target = $region108
        $region107: #{gg_bilinear.1} parent=103 // pred_region
          _
        $region108: #{gg_bilinear.1} parent=103 // pred_fallthru
          _
        %s339 = sand.u32 %s136, 1
        %s340 = sand.u32 %s136, 1
        %s341 = smul.addr %s340, 16
        %s342 = scalar_lea.vmem [#allocation4], %s341
        // Predicated region
        $region109: #{gg_bilinear.1} parent=103 // pred_check
          %p343 = pneg %p149
        $region110: #{gg_bilinear.1} parent=103 // pred_check_branch
          %345 = sbr.rel (%p343) target = $region112
        $region111: #{gg_bilinear.1} parent=103 // pred_region
          _
        $region112: #{gg_bilinear.1} parent=103 // pred_fallthru
          _
        %p346 = scmp.lt.s32.totalorder %s20, 1
        %s347 = scalar_select %p346, %s20, 1
        %p348 = scmp.lt.s32.totalorder %s21, 2
        %s349 = scalar_select %p348, %s21, 2
        %s350 = smul.addr %s347, 3
        %s351 = sadd.s32 %s349, %s350
        %s352 = smul.addr %s351, 8
        %s353 = scalar_lea.vmem %s0, %s352
        %p354 = pneg %p57
        %p355 = pneg %p54
        %s356 = sadd.s32 %s21, 1
        %p357 = scmp.lt.s32.totalorder %s20, 1
        %s358 = scalar_select %p357, %s20, 1
        %p359 = scmp.lt.s32.totalorder %s356, 2
        %s360 = scalar_select %p359, %s356, 2
        %s361 = smul.addr %s358, 3
        %s362 = sadd.s32 %s360, %s361
        %s363 = smul.addr %s362, 8
        %s364 = scalar_lea.vmem %s1, %s363
        %p365 = pneg %p87
        %p366 = pneg %p84
        %s367 = sand.u32 %s104, 1
        %s368 = sand.u32 %s104, 1
        %s369 = smul.addr %s368, 16
        %s370 = scalar_lea.vmem [#allocation3], %s369
        %p371 = pneg %p117
        %p372 = pneg %p114
        %s373 = sand.u32 %s136, 1
        %s374 = sand.u32 %s136, 1
        %s375 = smul.addr %s374, 16
        %s376 = scalar_lea.vmem [#allocation4], %s375
        %p377 = pneg %p149
        %p378 = pneg %p146
        %p379 = pneg %p179
        %p380 = pneg %p176
        %s381 = sand.u32 %s166, 1
        %s382 = sand.u32 %s166, 1
        %s383 = smul.addr %s382, 16
        %s384 = scalar_lea.vmem [#allocation5], %s383
        %p385 = scmp.lt.s32.totalorder %s20, 1
        %s386 = scalar_select %p385, %s20, 1
        %p387 = scmp.lt.s32.totalorder %s21, 2
        %s388 = scalar_select %p387, %s21, 2
        %s389 = smul.addr %s386, 3
        %s390 = sadd.s32 %s388, %s389
        %s391 = smul.addr %s390, 8
        %s392 = scalar_lea.vmem %s0, %s391
        %s393 = sadd.s32 %s21, 1
        %p394 = scmp.lt.s32.totalorder %s20, 1
        %s395 = scalar_select %p394, %s20, 1
        %p396 = scmp.lt.s32.totalorder %s393, 2
        %s397 = scalar_select %p396, %s393, 2
        %s398 = smul.addr %s395, 3
        %s399 = sadd.s32 %s397, %s398
        %s400 = smul.addr %s399, 8
        %s401 = scalar_lea.vmem %s1, %s400
        %s402 = sadd.s32 %s21, 1
        %s403 = smul.u32 2, %s22
        %s404 = sadd.s32 %s21, 1
        %s405 = smul.u32 2, %s22
        %s406 = smul.u32 2, %s22
        %p407 = scmp.eq.s32.totalorder %s22, 0
        // Predicated region
        $region113: #{gg_bilinear.1} parent=103 // pred_check
          %p408 = pneg %p407
        $region114: #{gg_bilinear.1} parent=103 // pred_check_branch
          %410 = sbr.rel (%p408) target = $region116
        $region115: #{gg_bilinear.1} parent=103 // pred_region
          %v411 = vld [vmem:[%s392] sm:$0xff]
          %v412 = vld [vmem:[%s401] sm:$0xff]
          %413 = vrot.lane.b32.xlu0 %v411, 126
          %v414 = vpop.permute.xlu0 %413
          %vm417 = vcmask 1046528
          %v418 = vrot.slane %v411, 1
          %v419 = vrot.slane %v412, 1
          %v420 = vsel %vm417, %v418, %v419
          %422 = vrot.lane.b32.xlu0 %v420, 126
          %v423 = vpop.permute.xlu0 %422
          %vm424 = vcmask 1045504
          %v425 = vrot.slane %v411, 2
          %v426 = vrot.slane %v412, 2
          %v427 = vsel %vm424, %v425, %v426
          %429 = vrot.lane.b32.xlu0 %v427, 126
          %v430 = vpop.permute.xlu0 %429
          %v431 = vlaneseq
          %v432 = vand.u32 %v431, 127
          %vm433 = vcmp.lt.s32.totalorder %v432, 0
          %v434 = vsub.s32 0, %v432
          %v435 = vsel %vm433, %v434, %v432
          %v436 = vshrl.u32 %v435, 1
          %v437 = vand.u32 %v435, 1
          %v438 = vsub.s32 0, %v437
          %v439 = vsel %vm433, %v438, %v437
          %vm440 = vcmp.ne.s32.totalorder %v439, 0
          %vm441 = vcmp.lt.s32.totalorder %v439, 0
          %vm442 = vmand %vm441, %vm440
          %v443 = vadd.s32 %v439, 2
          %v444 = vsel %vm442, %v443, %v439
          %vm445 = vcmp.eq.s32.totalorder %v444, 0
          %v446 = vsel %vm445, %v423, %v420
          %v447 = vsub.f32 %v411, %v446
          %v448 = vmul.f32 %v447, %v447
          %v449 = vadd.f32 %v448, 0.2
          %v450 = vrcp.pop %v449
          %v451 = vmul.f32 1.0, %v450
          %v452 = vsel %vm445, 0.0625, 0.1875
          %v453 = vmul.f32 %v451, %v452
          %v454 = vmul.f32 %v453, 1.442695
          %v455 = vpow.pop %v454
          %v456 = vsub.f32 %v414, %v446
          %v457 = vmul.f32 %v456, %v456
          %v458 = vadd.f32 %v457, 0.2
          %v459 = vrcp.pop %v458
          %v460 = vmul.f32 1.0, %v459
          %v461 = vsel %vm445, 0.1875, 0.0625
          %v462 = vmul.f32 %v460, %v461
          %v463 = vmul.f32 %v462, 1.442695
          %v464 = vpow.pop %v463
          %v466 = vrot.slane %v446, 7
          %v468 = vsub.f32 %v411, %v466
          %v469 = vsub.f32 %v412, %v466
          %v470 = vmul.f32 %v468, %v468
          %v471 = vmul.f32 %v469, %v469
          %v472 = vadd.f32 %v470, 0.2
          %v473 = vadd.f32 %v471, 0.2
          %v474 = vrcp.pop %v472
          %v475 = vmul.f32 1.0, %v474
          %v476 = vrcp.pop %v473
          %v477 = vmul.f32 1.0, %v476
          %v478 = vsel %vm445, 0.1875, 0.5625
          %v479 = vmul.f32 %v475, %v478
          %v480 = vmul.f32 %v477, %v478
          %v481 = vmul.f32 %v479, 1.442695
          %v482 = vpow.pop %v481
          %v483 = vmul.f32 %v480, 1.442695
          %v484 = vpow.pop %v483
          %v485 = vsub.f32 %v423, %v446
          %v486 = vmul.f32 %v485, %v485
          %v487 = vadd.f32 %v486, 0.2
          %v488 = vrcp.pop %v487
          %v489 = vmul.f32 1.0, %v488
          %v490 = vsel %vm445, 0.5625, 0.1875
          %v491 = vmul.f32 %v489, %v490
          %v492 = vmul.f32 %v491, 1.442695
          %v493 = vpow.pop %v492
          %v494 = vadd.f32 %v455, %v464
          %v497 = vrot.slane %v482, 1
          %v498 = vrot.slane %v484, 1
          %v499 = vsel %vm417, %v497, %v498
          %v501 = vadd.f32 %v494, %v499
          %v502 = vadd.f32 %v501, %v493
          %v503 = vrcp.pop %v502
          %v504 = vmul.f32 1.0, %v503
          %v505 = vmul.f32 %v455, %v504
          %506 = vst [vmem:[#allocation2] sm:$0xff] %v505
          %v507 = vmul.f32 %v464, %v504
          %s508 = scalar_lea.vmem [#allocation2], 8
          %509 = vst [vmem:[%s508] sm:$0xff] %v507
          %v511 = vrot.slane %v504, 7
          %v513 = vmul.f32 %v482, %v511
          %v514 = vmul.f32 %v484, %v511
          %s515 = scalar_lea.vmem [#allocation2], 16
          %516 = vst [vmem:[%s515 - $0x1] sm:$0xfe] %v513
          %517 = vst [vmem:[%s515 + $0x7] sm:$0x1] %v514
          %v518 = vmul.f32 %v493, %v504
          %s519 = scalar_lea.vmem [#allocation2], 24
          %520 = vst [vmem:[%s519] sm:$0xff] %v518
          %v521 = vrot.slane %v446, 6
          %v523 = vsub.f32 %v411, %v521
          %v524 = vsub.f32 %v412, %v521
          %v525 = vmul.f32 %v523, %v523
          %v526 = vmul.f32 %v524, %v524
          %v527 = vadd.f32 %v525, 0.2
          %v528 = vadd.f32 %v526, 0.2
          %v529 = vrcp.pop %v527
          %v530 = vmul.f32 1.0, %v529
          %v531 = vrcp.pop %v528
          %v532 = vmul.f32 1.0, %v531
          %v533 = vmul.f32 %v530, %v452
          %v534 = vmul.f32 %v532, %v452
          %v535 = vmul.f32 %v533, 1.442695
          %v536 = vpow.pop %v535
          %v537 = vmul.f32 %v534, 1.442695
          %v538 = vpow.pop %v537
          %v539 = vsub.f32 %v430, %v446
          %v540 = vmul.f32 %v539, %v539
          %v541 = vadd.f32 %v540, 0.2
          %v542 = vrcp.pop %v541
          %v543 = vmul.f32 1.0, %v542
          %v544 = vmul.f32 %v543, %v461
          %v545 = vmul.f32 %v544, 1.442695
          %v546 = vpow.pop %v545
          %v548 = vrot.slane %v493, 7
          %v550 = vadd.f32 %v482, %v548
          %v551 = vadd.f32 %v484, %v548
          %v554 = vrot.slane %v536, 1
          %v555 = vrot.slane %v538, 1
          %v556 = vsel %vm417, %v554, %v555
          %v559 = vadd.f32 %v550, %v556
          %v560 = vadd.f32 %v551, %v555
          %v562 = vrot.slane %v546, 7
          %v564 = vadd.f32 %v559, %v562
          %v565 = vadd.f32 %v560, %v562
          %v566 = vrcp.pop %v564
          %v567 = vmul.f32 1.0, %v566
          %v568 = vrcp.pop %v565
          %v569 = vmul.f32 1.0, %v568
          %v570 = vmul.f32 %v482, %v567
          %v571 = vmul.f32 %v484, %v569
          %s572 = scalar_lea.vmem [#allocation2], 32
          %573 = vst [vmem:[%s572 - $0x1] sm:$0xfe] %v570
          %574 = vst [vmem:[%s572 + $0x7] sm:$0x1] %v571
          %v577 = vrot.slane %v567, 1
          %v578 = vrot.slane %v569, 1
          %v579 = vsel %vm417, %v577, %v578
          %v581 = vmul.f32 %v493, %v579
          %s582 = scalar_lea.vmem [#allocation2], 40
          %583 = vst [vmem:[%s582] sm:$0xff] %v581
          %vm584 = vcmask 1040384
          %v585 = vrot.slane %v567, 7
          %v586 = vrot.slane %v569, 7
          %v587 = vsel %vm584, %v585, %v586
          %v590 = vmul.f32 %v536, %v585
          %v591 = vmul.f32 %v538, %v587
          %s592 = scalar_lea.vmem [#allocation2], 48
          %593 = vst [vmem:[%s592 - $0x2] sm:$0xfc] %v590
          %594 = vst [vmem:[%s592 + $0x6] sm:$0x3] %v591
          %v595 = vmul.f32 %v546, %v579
          %s596 = scalar_lea.vmem [#allocation2], 56
          %597 = vst [vmem:[%s596] sm:$0xff] %v595
        $region116: #{gg_bilinear.1} parent=103 // pred_fallthru
          _
        %v598 = vld [vmem:[%s335] sm:$0xff]
        %v599 = vld [vmem:[%s335 + $0x8] sm:$0xff]
        %v600 = vld [vmem:[%s342] sm:$0xff]
        %v601 = vld [vmem:[%s342 + $0x8] sm:$0xff]
        %602 = vrot.lane.b32.xlu0 %v598, 126
        %v603 = vpop.permute.xlu0 %602
        %604 = vrot.lane.b32.xlu0 %v599, 126
        %v605 = vpop.permute.xlu0 %604
        %vm610 = vcmask 1046528
        %v611 = vrot.slane %v598, 1
        %v612 = vrot.slane %v600, 1
        %v613 = vsel %vm610, %v611, %v612
        %v614 = vrot.slane %v599, 1
        %v615 = vrot.slane %v601, 1
        %v616 = vsel %vm610, %v614, %v615
        %619 = vrot.lane.b32.xlu0 %v613, 126
        %v620 = vpop.permute.xlu0 %619
        %621 = vrot.lane.b32.xlu0 %v616, 126
        %v622 = vpop.permute.xlu0 %621
        %vm623 = vcmask 1045504
        %v624 = vrot.slane %v598, 2
        %v625 = vrot.slane %v600, 2
        %v626 = vsel %vm623, %v624, %v625
        %v627 = vrot.slane %v599, 2
        %v628 = vrot.slane %v601, 2
        %v629 = vsel %vm623, %v627, %v628
        %632 = vrot.lane.b32.xlu0 %v626, 126
        %v633 = vpop.permute.xlu0 %632
        %634 = vrot.lane.b32.xlu0 %v629, 126
        %v635 = vpop.permute.xlu0 %634
        %v636 = vld [vmem:[#allocation2] sm:$0xff]
        %v637 = vmul.f32 %v636, %v598
        %v638 = vmul.f32 %v636, %v599
        %s639 = scalar_lea.vmem [#allocation2], 8
        %v640 = vld [vmem:[%s639] sm:$0xff]
        %v641 = vmul.f32 %v640, %v603
        %v642 = vmul.f32 %v640, %v605
        %v643 = vadd.f32 %v637, %v641
        %v644 = vadd.f32 %v638, %v642
        %s645 = scalar_lea.vmem [#allocation2], 16
        %v646 = vld [vmem:[%s645] sm:$0xff]
        %v647 = vmul.f32 %v646, %v613
        %v648 = vmul.f32 %v646, %v616
        %v649 = vadd.f32 %v643, %v647
        %v650 = vadd.f32 %v644, %v648
        %s651 = scalar_lea.vmem [#allocation2], 24
        %v652 = vld [vmem:[%s651] sm:$0xff]
        %v653 = vmul.f32 %v652, %v620
        %v654 = vmul.f32 %v652, %v622
        %v655 = vadd.f32 %v649, %v653
        %v656 = vadd.f32 %v650, %v654
        %vm657 = vcmask 261120
        %658 = vst.msk [vmem:[%s384] sm:$0xff] %vm657, %v655
        %659 = vst.msk [vmem:[%s384 + $0x8] sm:$0xff] %vm657, %v656
        %s660 = scalar_lea.vmem [#allocation2], 32
        %v661 = vld [vmem:[%s660] sm:$0xff]
        %v662 = vmul.f32 %v661, %v613
        %v663 = vmul.f32 %v661, %v616
        %s664 = scalar_lea.vmem [#allocation2], 40
        %v665 = vld [vmem:[%s664] sm:$0xff]
        %v666 = vmul.f32 %v665, %v620
        %v667 = vmul.f32 %v665, %v622
        %v668 = vadd.f32 %v662, %v666
        %v669 = vadd.f32 %v663, %v667
        %s670 = scalar_lea.vmem [#allocation2], 48
        %v671 = vld [vmem:[%s670] sm:$0xff]
        %v672 = vmul.f32 %v671, %v626
        %v673 = vmul.f32 %v671, %v629
        %v674 = vadd.f32 %v668, %v672
        %v675 = vadd.f32 %v669, %v673
        %s676 = scalar_lea.vmem [#allocation2], 56
        %v677 = vld [vmem:[%s676] sm:$0xff]
        %v678 = vmul.f32 %v677, %v633
        %v679 = vmul.f32 %v677, %v635
        %v680 = vadd.f32 %v674, %v678
        %v681 = vadd.f32 %v675, %v679
        %684 = vrot.lane.b32.xlu0 %v680, 32
        %v685 = vpop.permute.xlu0 %684
        %686 = vrot.lane.b32.xlu0 %v681, 32
        %v687 = vpop.permute.xlu0 %686
        %vm690 = vcmask 523520
        %691 = vst.msk [vmem:[%s384] sm:$0xff] %vm690, %v685
        %692 = vst.msk [vmem:[%s384 + $0x8] sm:$0xff] %vm690, %v687
        %s693 = sand.u32 %s166, 1
        %s694 = sand.u32 %s166, 1
        %s695 = smul.addr %s694, 16
        %s696 = scalar_lea.vmem [#allocation5], %s695
        // Predicated region
        $region117: #{gg_bilinear.1} parent=103 // pred_check
          %p697 = pneg %p176
        $region118: #{gg_bilinear.1} parent=103 // pred_check_branch
          %699 = sbr.rel (%p697) target = $region120
        $region119: #{gg_bilinear.1} parent=103 // pred_region
          %s700 = smul.u32 2, %s22
          %s701 = smul.addr %s700, 2
          %s702 = sadd.s32 %s21, %s701
          %s703 = smul.addr %s20, 8
          %s704 = sadd.s32 %s702, %s703
          %s705 = smul.addr %s704, 8
          %s706 = scalar_lea.vmem %s4, %s705
          // Predicated region
          $region121: #{gg_bilinear.1} parent=119 // pred_check
            _
          $region122: #{gg_bilinear.1} parent=119 // pred_check_branch
            %708 = sbr.rel (0) target = $region124
          $region123: #{gg_bilinear.1} parent=119 // pred_region
            // Predicated region
            $region125: #{gg_bilinear.1} parent=123 // pred_check
              _
            $region126: #{gg_bilinear.1} parent=123 // pred_check_branch
              %710 = sbr.rel (0) target = $region128
            $region127: #{gg_bilinear.1} parent=123 // pred_region
              // Predicated region
              $region140: #{gg_bilinear.1} parent=127 // pred_check
                _
              $region141: #{gg_bilinear.1} parent=127 // pred_check_branch
                %728 = sbr.rel (0) target = $region143
              $region142: #{gg_bilinear.1} parent=127 // pred_region
                loop: start=0, step=1, limit=1
                $region144: #{gg_bilinear.1} parent=142 // loop_pre_header
                  _
                $region145: #{gg_bilinear.1} parent=142 // loop_header
                  %s730 = sphi 0, %s734
                  %p731 = scmp.ge.s32.totalorder %s730, 1
                  %s735 = sphi %s696, %s696
                  %s736 = sphi %s706, %s706
                $region146: #{gg_bilinear.1} parent=142 // loop_header_branch
                  %733 = sbr.rel (%p731) target = $region150
                $region147: #{gg_bilinear.1} parent=142 // loop_body
                  %v737 = vld [vmem:[%s735] sm:$0xff]
                  %738 = vst [vmem:[%s736] sm:$0xff] %v737
                  %v739 = vld [vmem:[%s735 + $0x8] sm:$0xff]
                  %740 = vst [vmem:[%s736 + $0x10] sm:$0xff] %v739
                $region148: #{gg_bilinear.1} parent=142 // loop_footer
                  %s734 = sadd.s32 1, %s730
                $region149: #{gg_bilinear.1} parent=142 // loop_footer_branch
                  %729 = sbr.rel target = $region145
                $region150: #{gg_bilinear.1} parent=142 // loop_exit
                  _
              $region143: #{gg_bilinear.1} parent=127 // pred_fallthru
                _
              // Predicated region
              $region151: #{gg_bilinear.1} parent=127 // pred_check
                _
              $region152: #{gg_bilinear.1} parent=127 // pred_check_branch
                %742 = sbr.rel target = $region154
              $region153: #{gg_bilinear.1} parent=127 // pred_region
                _
              $region154: #{gg_bilinear.1} parent=127 // pred_fallthru
                _
            $region128: #{gg_bilinear.1} parent=123 // pred_fallthru
              _
            // Predicated region
            $region129: #{gg_bilinear.1} parent=123 // pred_check
              _
            $region130: #{gg_bilinear.1} parent=123 // pred_check_branch
              %712 = sbr.rel target = $region132
            $region131: #{gg_bilinear.1} parent=123 // pred_region
              %s714 = ssub.s32 256, 1
              loop: start=0, step=1, limit=1
              $region133: #{gg_bilinear.1} parent=131 // loop_pre_header
                _
              $region134: #{gg_bilinear.1} parent=131 // loop_header
                %s716 = sphi 0, %s720
                %p717 = scmp.ge.s32.totalorder %s716, 1
                %s721 = sphi %s696, %s696
                %s722 = sphi %s706, %s706
              $region135: #{gg_bilinear.1} parent=131 // loop_header_branch
                %719 = sbr.rel (%p717) target = $region139
              $region136: #{gg_bilinear.1} parent=131 // loop_body
                %v723 = vld [vmem:[%s721] sm:%s714]
                %724 = vst [vmem:[%s722] sm:%s714] %v723
                %v725 = vld [vmem:[%s721 + $0x8] sm:%s714]
                %726 = vst [vmem:[%s722 + $0x10] sm:%s714] %v725
              $region137: #{gg_bilinear.1} parent=131 // loop_footer
                %s720 = sadd.s32 1, %s716
              $region138: #{gg_bilinear.1} parent=131 // loop_footer_branch
                %715 = sbr.rel target = $region134
              $region139: #{gg_bilinear.1} parent=131 // loop_exit
                _
            $region132: #{gg_bilinear.1} parent=123 // pred_fallthru
              _
          $region124: #{gg_bilinear.1} parent=119 // pred_fallthru
            _
          %743 = vnop
        $region120: #{gg_bilinear.1} parent=103 // pred_fallthru
          _
      $region104: #{gg_bilinear.1} parent=5 // pred_fallthru
        _
      %p744 = scmp.le.s32.totalorder 2, %s10
      // Predicated region
      $region155: #{gg_bilinear.1} parent=5 // pred_check
        %p745 = pneg %p744
      $region156: #{gg_bilinear.1} parent=5 // pred_check_branch
        %747 = sbr.rel (%p745) target = $region158
      $region157: #{gg_bilinear.1} parent=5 // pred_region
        %s748 = ssub.s32 %s10, 2
        // Predicated region
        $region159: #{gg_bilinear.1} parent=157 // pred_check
          %p749 = pneg %p182
        $region160: #{gg_bilinear.1} parent=157 // pred_check_branch
          %751 = sbr.rel (%p749) target = $region162
        $region161: #{gg_bilinear.1} parent=157 // pred_region
          %s752 = sand.u32 %s167, 1
          %s753 = sand.u32 %s167, 1
          %s754 = smul.addr %s753, 16
          %s755 = scalar_lea.vmem [#allocation5], %s754
        $region162: #{gg_bilinear.1} parent=157 // pred_fallthru
          _
      $region158: #{gg_bilinear.1} parent=5 // pred_fallthru
        _
    $region6: #{gg_bilinear.1} parent=1 // loop_footer
      %s14 = sadd.s32 1, %s10
    $region7: #{gg_bilinear.1} parent=1 // loop_footer_branch
      %9 = sbr.rel target = $region3
    $region8: #{gg_bilinear.1} parent=1 // loop_exit
      _

</llo_original>
